<compile_context>
chip_gen: v7x
topology: tpu7x:2x2x1
jax: 0.10.0
libtpu: 0.0.40
codegen_flags: <defaults>
</compile_context>

<pallas_src>
import functools

import jax
import jax.numpy as jnp
from jax.experimental import pallas as pl
from jax.experimental.pallas import tpu as pltpu


# ----------------------------------------------------------------------------
# Helpers
# ----------------------------------------------------------------------------
def _round_up(x, m):
    return (x + m - 1) // m * m


def _pad2(a, rows, cols):
    return jnp.pad(a, ((0, rows - a.shape[0]), (0, cols - a.shape[1])))


def _vmem_budget_bytes():
    """~80% of physical VMEM per TensorCore (64 MiB on v7x, 128 MiB v5e/v6e)."""
    try:
        cap = int(pltpu.get_tpu_info().vmem_capacity_bytes)
    except Exception:
        cap = 64 * 1024 * 1024   # conservative fallback (v7x per-TC size)
    return int(0.8 * cap)


@functools.lru_cache(maxsize=1)
def _single_buffer_weights_supported():
    """Probe whether pipeline_mode=pl.Buffered(1) lowers/runs on this stack."""
    try:
        def _probe(w_ref, x_ref, o_ref):
            o_ref[...] = x_ref[...] + w_ref[...]

        f = pl.pallas_call(
            _probe,
            out_shape=jax.ShapeDtypeStruct((16, 128), jnp.float32),
            grid=(2,),
            in_specs=[pl.BlockSpec((8, 128), lambda i: (0, 0),
                                   pipeline_mode=pl.Buffered(1)),
                      pl.BlockSpec((8, 128), lambda i: (i, 0))],
            out_specs=pl.BlockSpec((8, 128), lambda i: (i, 0)),
        )
        jax.block_until_ready(
            f(jnp.ones((8, 128), jnp.float32), jnp.ones((16, 128), jnp.float32)))
        return True
    except Exception:
        return False


# ----------------------------------------------------------------------------
# Kernel
# ----------------------------------------------------------------------------
def _encoder_kernel(x_ref, w1_ref, b1_ref, wh_ref, bmu_ref, bvar_ref,
                    mu_ref, var_ref):
    cd = w1_ref.dtype
    # f32 -> compute-dtype cast happens here on the VPU (free slot under the
    # MXU); contraction over the unpadded input_dim is handled by Mosaic.
    x = x_ref[...].astype(cd)
    h = jnp.dot(x, w1_ref[...], preferred_element_type=jnp.float32)
    h = jnp.maximum(h + b1_ref[...], 0.0).astype(cd)

    # One lane-dense MXU pass over the fused [mu | var] head, split at a
    # 128-aligned boundary, two lane-dense unmasked stores.
    y = jnp.dot(h, wh_ref[...], preferred_element_type=jnp.float32)
    nh = mu_ref.shape[-1]
    mu_ref[...] = (y[:, :nh] + bmu_ref[...]).astype(mu_ref.dtype)
    var_ref[...] = (y[:, nh:] + bvar_ref[...]).astype(var_ref.dtype)


# ----------------------------------------------------------------------------
# One-time parameter packing (keep OUT of the per-call hot path)
# ----------------------------------------------------------------------------
def prepare_encoder_params(params, *, compute_dtype=jnp.bfloat16, lane_align=128):
    """Pack Encoder weights once for the Pallas kernel.

    params: dict of [in, out]-layout weights:
        w1 [input_dim, hidden], b1 [1, hidden]
        wmu/wvar [hidden, out_dim], bmu/bvar [1, out_dim]
    compute_dtype: matmul operand dtype (bf16 = MXU native; pass jnp.float32
        if exact f32 parity with PyTorch matters more than speed).
    lane_align: 128 by default; use 256 on v6e/v7x only when MXU-bound (their
        MXUs are 256 wide) -- this model is DMA-bound at typical sizes.
    Returns (packed_arrays_dict, out_dim).
    """
    cd = jnp.dtype(compute_dtype)
    input_dim, hidden_dim = params["w1"].shape
    out_dim = params["wmu"].shape[1]
    H = _round_up(hidden_dim, lane_align)    # hidden / head-contraction dim
    Nh = _round_up(out_dim, lane_align)      # per-head lane-aligned output

    packed = {
        # K (input_dim) stays unpadded so x needs no feature padding.
        "w1": _pad2(params["w1"], input_dim, H).astype(cd),
        "b1": _pad2(params["b1"].astype(jnp.float32), 1, H),
        # Fused [mu | var] head weight, each head padded to its own 128-multiple.
        "wh": jnp.concatenate([_pad2(params["wmu"], H, Nh),
                               _pad2(params["wvar"], H, Nh)], axis=1).astype(cd),
        "bmu": _pad2(params["bmu"].astype(jnp.float32), 1, Nh),
        "bvar": _pad2(params["bvar"].astype(jnp.float32), 1, Nh),
    }
    packed = jax.block_until_ready(packed)   # materialize once
    return packed, out_dim


# ----------------------------------------------------------------------------
# Forward pass
# ----------------------------------------------------------------------------
@functools.partial(
    jax.jit,
    static_argnames=("nb_attributes", "latent_dim", "out_dim", "block_b",
                     "out_dtype", "single_buffer_weights"))
def _encoder_forward_impl(x, packed, *, nb_attributes, latent_dim, out_dim,
                          block_b, out_dtype, single_buffer_weights):
    B, input_dim = x.shape
    k1, H = packed["w1"].shape
    assert k1 == input_dim, "packed params do not match input_dim"
    Nh = packed["bmu"].shape[1]
    cd = packed["w1"].dtype
    od = jnp.dtype(out_dtype)

    vmem_budget = _vmem_budget_bytes()
    wbuf = 1 if single_buffer_weights else 2

    def footprint(tb):
        # double-buffered x tile + two double-buffered output tiles
        # + resident weights/biases + f32 temporaries (h, y).
        return (2 * tb * input_dim * 4
                + 2 * 2 * tb * Nh * od.itemsize
                + wbuf * (packed["w1"].size * cd.itemsize
                          + packed["wh"].size * cd.itemsize
                          + (H + 2 * Nh) * 4)
                + tb * H * 4 + 2 * tb * Nh * 4)

    # >= 2 grid steps so both v7x TensorCores get work; balanced tiles keep
    # batch-padding waste < 8 rows; TB shrinks if the footprint is too big.
    nsteps = max(1, min(max(2, pl.cdiv(B, block_b)), pl.cdiv(B, 8)))
    TB = _round_up(pl.cdiv(B, nsteps), 8)
    while TB > 8 and footprint(TB) > vmem_budget:
        TB = _round_up(pl.cdiv(TB, 2), 8)
    nsteps = pl.cdiv(B, TB)
    Bp = nsteps * TB

    x_p = jnp.pad(x, ((0, Bp - B), (0, 0))) if Bp != B else x

    cost = pl.CostEstimate(
        flops=2 * Bp * H * (input_dim + 2 * Nh),
        transcendentals=0,
        bytes_accessed=(Bp * input_dim * 4
                        + (packed["w1"].size + packed["wh"].size) * cd.itemsize
                        + (H + 2 * Nh) * 4
                        + 2 * Bp * Nh * od.itemsize))

    # Constant-index-map operands never need a second buffer.
    wmode = {"pipeline_mode": pl.Buffered(1)} if single_buffer_weights else {}

    mu_p, var_p = pl.pallas_call(
        _encoder_kernel,
        out_shape=(jax.ShapeDtypeStruct((Bp, Nh), od),
                   jax.ShapeDtypeStruct((Bp, Nh), od)),
        grid=(nsteps,),
        in_specs=[
            pl.BlockSpec((TB, input_dim), lambda i: (i, 0)),            # x tile
            pl.BlockSpec((input_dim, H), lambda i: (0, 0), **wmode),    # w1
            pl.BlockSpec((1, H), lambda i: (0, 0), **wmode),            # b1
            pl.BlockSpec((H, 2 * Nh), lambda i: (0, 0), **wmode),       # [wmu|wvar]
            pl.BlockSpec((1, Nh), lambda i: (0, 0), **wmode),           # bmu
            pl.BlockSpec((1, Nh), lambda i: (0, 0), **wmode),           # bvar
        ],
        out_specs=(pl.BlockSpec((TB, Nh), lambda i: (i, 0)),
                   pl.BlockSpec((TB, Nh), lambda i: (i, 0))),
        compiler_params=pltpu.CompilerParams(
            dimension_semantics=("parallel",),
            vmem_limit_bytes=int(min(vmem_budget,
                                     max(2 * footprint(TB), 8 * 1024 * 1024)))),
        cost_estimate=cost,
    )(x_p, packed["w1"], packed["b1"], packed["wh"], packed["bmu"],
      packed["bvar"])

    split = nb_attributes * latent_dim
    mu = mu_p[:B, :out_dim]
    var = var_p[:B, :out_dim]
    return ((mu[:, :split], mu[:, split:]), (var[:, :split], var[:, split:]))


def encoder_forward(x, packed, *, nb_attributes, latent_dim, out_dim,
                    block_b=512, out_dtype=jnp.float32,
                    single_buffer_weights=None):
    """Encoder forward pass. `packed` comes from prepare_encoder_params()."""
    if single_buffer_weights is None:
        single_buffer_weights = _single_buffer_weights_supported()
    return _encoder_forward_impl(
        x, packed,
        nb_attributes=int(nb_attributes), latent_dim=int(latent_dim),
        out_dim=int(out_dim), block_b=int(block_b),
        out_dtype=jnp.dtype(out_dtype),
        single_buffer_weights=bool(single_buffer_weights))


# ----------------------------------------------------------------------------
# Parameter init + references
# ----------------------------------------------------------------------------
def init_encoder_params(key, input_dim, hidden_dim, nb_attributes, latent_dim,
                        cntx_latent_dim):
    """Deterministic synthetic parameters; weights stored as [in, out]."""
    out_dim = latent_dim * nb_attributes + cntx_latent_dim
    k = jax.random.split(key, 6)
    return {
        "w1":   jax.random.normal(k[0], (input_dim, hidden_dim), jnp.float32) * 0.05,
        "b1":   jax.random.normal(k[1], (1, hidden_dim), jnp.float32) * 0.05,
        "wmu":  jax.random.normal(k[2], (hidden_dim, out_dim), jnp.float32) * 0.05,
        "bmu":  jax.random.normal(k[3], (1, out_dim), jnp.float32) * 0.05,
        "wvar": jax.random.normal(k[4], (hidden_dim, out_dim), jnp.float32) * 0.05,
        "bvar": jax.random.normal(k[5], (1, out_dim), jnp.float32) * 0.05,
    }


def _split_heads(mu, var, nb_attributes, latent_dim):
    s = nb_attributes * latent_dim
    return ((mu[:, :s], mu[:, s:]), (var[:, :s], var[:, s:]))


def _reference_forward_f32(x, params, nb_attributes, latent_dim):
    """Pure-f32 JAX reference (exact PyTorch semantics)."""
    h = jnp.maximum(x @ params["w1"] + params["b1"], 0.0)
    mu = h @ params["wmu"] + params["bmu"]
    var = h @ params["wvar"] + params["bvar"]
    return _split_heads(mu, var, nb_attributes, latent_dim)


def _reference_forward_cast(x, params, nb_attributes, latent_dim, compute_dtype):
    """Reference mirroring the kernel's bf16-operand / f32-accumulate path."""
    cd = compute_dtype
    h = jnp.dot(x.astype(cd), params["w1"].astype(cd),
                preferred_element_type=jnp.float32)
    h = jnp.maximum(h + params["b1"], 0.0).astype(cd)
    mu = jnp.dot(h, params["wmu"].astype(cd),
                 preferred_element_type=jnp.float32) + params["bmu"]
    var = jnp.dot(h, params["wvar"].astype(cd),
                  preferred_element_type=jnp.float32) + params["bvar"]
    return _split_heads(mu, var, nb_attributes, latent_dim)


# ----------------------------------------------------------------------------
# Demo / self-test
# ----------------------------------------------------------------------------
if __name__ == "__main__":
    # Small shapes consistent with the module; B is NOT a multiple of 8 to
    # exercise the batch padding path and still yields 2 grid steps.
    batch = 10
    input_dim = 32
    hidden_dim = 32
    nb_attributes = 4
    latent_dim = 8
    cntx_latent_dim = 16        # out_dim = 4*8 + 16 = 48

    key = jax.random.PRNGKey(0)
    kx, kp = jax.random.split(key)
    x = jax.random.normal(kx, (batch, input_dim), jnp.float32)
    params = init_encoder_params(kp, input_dim, hidden_dim, nb_attributes,
                                 latent_dim, cntx_latent_dim)

    # One-time weight packing, outside the per-call hot path.
    packed, out_dim = prepare_encoder_params(params)

    (mu_a, mu_c), (var_a, var_c) = jax.block_until_ready(
        encoder_forward(x, packed, nb_attributes=nb_attributes,
                        latent_dim=latent_dim, out_dim=out_dim))

    # Tight check against a reference that follows the same bf16/f32 path.
    (cmu_a, cmu_c), (cvar_a, cvar_c) = _reference_forward_cast(
        x, params, nb_attributes, latent_dim, jnp.bfloat16)
    for got, ref in [(mu_a, cmu_a), (mu_c, cmu_c), (var_a, cvar_a), (var_c, cvar_c)]:
        assert got.shape == ref.shape
        assert jnp.allclose(got, ref, atol=2e-3, rtol=2e-3), \
            float(jnp.max(jnp.abs(got - ref)))

    # Loose check against the exact f32 PyTorch-equivalent reference.
    (rmu_a, rmu_c), (rvar_a, rvar_c) = _reference_forward_f32(
        x, params, nb_attributes, latent_dim)
    for got, ref in [(mu_a, rmu_a), (mu_c, rmu_c), (var_a, rvar_a), (var_c, rvar_c)]:
        assert jnp.allclose(got, ref, atol=5e-2, rtol=5e-2), \
            float(jnp.max(jnp.abs(got - ref)))

    print("KERNEL_OK")
</pallas_src>

<mosaic_0001>
module attributes {stable_mosaic.version = 11 : i64} {
  func.func @_probe(%arg0: i32, %arg1: memref<8x128xf32, #tpu.memory_space<vmem>>, %arg2: memref<8x128xf32, #tpu.memory_space<vmem>>, %arg3: memref<8x128xf32, #tpu.memory_space<vmem>>) attributes {dimension_semantics = [#tpu.dimension_semantics<arbitrary>], iteration_bounds = array<i64: 2>, scalar_prefetch = 0 : i64, scratch_operands = 0 : i64, tpu.core_type = #tpu.core_type<tc>, window_params = [{pipeline_mode = #tpu.pipeline_mode<synchronous>, transform_indices = @transform_0, window_bounds = array<i64: 8, 128>}, {transform_indices = @transform_1, window_bounds = array<i64: 8, 128>}, {transform_indices = @transform_2, window_bounds = array<i64: 8, 128>}]} {
    %c0 = arith.constant 0 : index
    %c0_0 = arith.constant 0 : index
    %0 = vector.load %arg2[%c0, %c0_0] : memref<8x128xf32, #tpu.memory_space<vmem>>, vector<8x128xf32>
    %c0_1 = arith.constant 0 : index
    %c0_2 = arith.constant 0 : index
    %1 = vector.load %arg1[%c0_1, %c0_2] : memref<8x128xf32, #tpu.memory_space<vmem>>, vector<8x128xf32>
    %2 = arith.addf %0, %1 : vector<8x128xf32>
    %c0_3 = arith.constant 0 : index
    %c0_4 = arith.constant 0 : index
    %3 = vector.load %arg3[%c0_3, %c0_4] : memref<8x128xf32, #tpu.memory_space<vmem>>, vector<8x128xf32>
    tpu.vector_store %arg3[%c0_3, %c0_4], %2 {strides = array<i32>} : memref<8x128xf32, #tpu.memory_space<vmem>>, vector<8x128xf32>,
    return
  }
  func.func @transform_0(%arg0: i32) -> (i32, i32) {
    %c0_i32 = arith.constant 0 : i32
    %c0_i32_0 = arith.constant 0 : i32
    %c0_i32_1 = arith.constant 0 : i32
    return %c0_i32, %c0_i32_0 : i32, i32
  }
  func.func @transform_1(%arg0: i32) -> (i32, i32) {
    %c0_i32 = arith.constant 0 : i32
    %c0_i32_0 = arith.constant 0 : i32
    return %arg0, %c0_i32 : i32, i32
  }
  func.func @transform_2(%arg0: i32) -> (i32, i32) {
    %c0_i32 = arith.constant 0 : i32
    %c0_i32_0 = arith.constant 0 : i32
    return %arg0, %c0_i32 : i32, i32
  }
}

module attributes {stable_mosaic.version = 11 : i64} {
  func.func @_encoder_kernel(%arg0: i32, %arg1: memref<8x32xf32, #tpu.memory_space<vmem>>, %arg2: memref<32x128xbf16, #tpu.memory_space<vmem>>, %arg3: memref<1x128xf32, #tpu.memory_space<vmem>>, %arg4: memref<128x256xbf16, #tpu.memory_space<vmem>>, %arg5: memref<1x128xf32, #tpu.memory_space<vmem>>, %arg6: memref<1x128xf32, #tpu.memory_space<vmem>>, %arg7: memref<8x128xf32, #tpu.memory_space<vmem>>, %arg8: memref<8x128xf32, #tpu.memory_space<vmem>>) attributes {dimension_semantics = [#tpu.dimension_semantics<parallel>], iteration_bounds = array<i64: 2>, scalar_prefetch = 0 : i64, scratch_operands = 0 : i64, tpu.core_type = #tpu.core_type<tc>, window_params = [{transform_indices = @transform_0, window_bounds = array<i64: 8, 32>}, {pipeline_mode = #tpu.pipeline_mode<synchronous>, transform_indices = @transform_1, window_bounds = array<i64: 32, 128>}, {pipeline_mode = #tpu.pipeline_mode<synchronous>, transform_indices = @transform_2, window_bounds = array<i64: 1, 128>}, {pipeline_mode = #tpu.pipeline_mode<synchronous>, transform_indices = @transform_3, window_bounds = array<i64: 128, 256>}, {pipeline_mode = #tpu.pipeline_mode<synchronous>, transform_indices = @transform_4, window_bounds = array<i64: 1, 128>}, {pipeline_mode = #tpu.pipeline_mode<synchronous>, transform_indices = @transform_5, window_bounds = array<i64: 1, 128>}, {transform_indices = @transform_6, window_bounds = array<i64: 8, 128>}, {transform_indices = @transform_7, window_bounds = array<i64: 8, 128>}]} {
    %c0 = arith.constant 0 : index
    %c0_0 = arith.constant 0 : index
    %0 = vector.load %arg1[%c0, %c0_0] : memref<8x32xf32, #tpu.memory_space<vmem>>, vector<8x32xf32>
    %1 = arith.truncf %0 : vector<8x32xf32> to vector<8x32xbf16>
    %c0_1 = arith.constant 0 : index
    %c0_2 = arith.constant 0 : index
    %2 = vector.load %arg2[%c0_1, %c0_2] : memref<32x128xbf16, #tpu.memory_space<vmem>>, vector<32x128xbf16>
    %cst = arith.constant dense<0.000000e+00> : vector<8x128xf32>
    %3 = tpu.matmul %1, %2, %cst {dimension_numbers = #tpu.dot_dimension_numbers<[1], [0], [0], [1], [0, 0, 1, 1], [], []>} : vector<8x32xbf16>, vector<32x128xbf16>, vector<8x128xf32> -> vector<8x128xf32>
    %c0_3 = arith.constant 0 : index
    %c0_4 = arith.constant 0 : index
    %4 = vector.load %arg3[%c0_3, %c0_4] : memref<1x128xf32, #tpu.memory_space<vmem>>, vector<1x128xf32>
    %5 = vector.broadcast %4 : vector<1x128xf32> to vector<8x128xf32>
    %6 = arith.addf %3, %5 : vector<8x128xf32>
    %cst_5 = arith.constant 0.000000e+00 : f32
    %7 = vector.broadcast %cst_5 : f32 to vector<8x128xf32>
    %8 = arith.maximumf %6, %7 : vector<8x128xf32>
    %9 = arith.truncf %8 : vector<8x128xf32> to vector<8x128xbf16>
    %c0_6 = arith.constant 0 : index
    %c0_7 = arith.constant 0 : index
    %10 = vector.load %arg4[%c0_6, %c0_7] : memref<128x256xbf16, #tpu.memory_space<vmem>>, vector<128x256xbf16>
    %cst_8 = arith.constant dense<0.000000e+00> : vector<8x256xf32>
    %11 = tpu.matmul %9, %10, %cst_8 {dimension_numbers = #tpu.dot_dimension_numbers<[1], [0], [0], [1], [0, 0, 1, 1], [], []>} : vector<8x128xbf16>, vector<128x256xbf16>, vector<8x256xf32> -> vector<8x256xf32>
    %12 = vector.extract_strided_slice %11 {offsets = [0, 0], sizes = [8, 128], strides = [1, 1]} : vector<8x256xf32> to vector<8x128xf32>
    %c0_9 = arith.constant 0 : index
    %c0_10 = arith.constant 0 : index
    %13 = vector.load %arg5[%c0_9, %c0_10] : memref<1x128xf32, #tpu.memory_space<vmem>>, vector<1x128xf32>
    %14 = vector.broadcast %13 : vector<1x128xf32> to vector<8x128xf32>
    %15 = arith.addf %12, %14 : vector<8x128xf32>
    %c0_11 = arith.constant 0 : index
    %c0_12 = arith.constant 0 : index
    %16 = vector.load %arg7[%c0_11, %c0_12] : memref<8x128xf32, #tpu.memory_space<vmem>>, vector<8x128xf32>
    tpu.vector_store %arg7[%c0_11, %c0_12], %15 {strides = array<i32>} : memref<8x128xf32, #tpu.memory_space<vmem>>, vector<8x128xf32>,
    %17 = vector.extract_strided_slice %11 {offsets = [0, 128], sizes = [8, 128], strides = [1, 1]} : vector<8x256xf32> to vector<8x128xf32>
    %c0_13 = arith.constant 0 : index
    %c0_14 = arith.constant 0 : index
    %18 = vector.load %arg6[%c0_13, %c0_14] : memref<1x128xf32, #tpu.memory_space<vmem>>, vector<1x128xf32>
    %19 = vector.broadcast %18 : vector<1x128xf32> to vector<8x128xf32>
    %20 = arith.addf %17, %19 : vector<8x128xf32>
    %c0_15 = arith.constant 0 : index
    %c0_16 = arith.constant 0 : index
    %21 = vector.load %arg8[%c0_15, %c0_16] : memref<8x128xf32, #tpu.memory_space<vmem>>, vector<8x128xf32>
    tpu.vector_store %arg8[%c0_15, %c0_16], %20 {strides = array<i32>} : memref<8x128xf32, #tpu.memory_space<vmem>>, vector<8x128xf32>,
    return
  }
  func.func @transform_0(%arg0: i32) -> (i32, i32) {
    %c0_i32 = arith.constant 0 : i32
    %c0_i32_0 = arith.constant 0 : i32
    return %arg0, %c0_i32 : i32, i32
  }
  func.func @transform_1(%arg0: i32) -> (i32, i32) {
    %c0_i32 = arith.constant 0 : i32
    %c0_i32_0 = arith.constant 0 : i32
    %c0_i32_1 = arith.constant 0 : i32
    return %c0_i32, %c0_i32_0 : i32, i32
  }
  func.func @transform_2(%arg0: i32) -> (i32, i32) {
    %c0_i32 = arith.constant 0 : i32
    %c0_i32_0 = arith.constant 0 : i32
    %c0_i32_1 = arith.constant 0 : i32
    return %c0_i32, %c0_i32_0 : i32, i32
  }
  func.func @transform_3(%arg0: i32) -> (i32, i32) {
    %c0_i32 = arith.constant 0 : i32
    %c0_i32_0 = arith.constant 0 : i32
    %c0_i32_1 = arith.constant 0 : i32
    return %c0_i32, %c0_i32_0 : i32, i32
  }
  func.func @transform_4(%arg0: i32) -> (i32, i32) {
    %c0_i32 = arith.constant 0 : i32
    %c0_i32_0 = arith.constant 0 : i32
    %c0_i32_1 = arith.constant 0 : i32
    return %c0_i32, %c0_i32_0 : i32, i32
  }
  func.func @transform_5(%arg0: i32) -> (i32, i32) {
    %c0_i32 = arith.constant 0 : i32
    %c0_i32_0 = arith.constant 0 : i32
    %c0_i32_1 = arith.constant 0 : i32
    return %c0_i32, %c0_i32_0 : i32, i32
  }
  func.func @transform_6(%arg0: i32) -> (i32, i32) {
    %c0_i32 = arith.constant 0 : i32
    %c0_i32_0 = arith.constant 0 : i32
    return %arg0, %c0_i32 : i32, i32
  }
  func.func @transform_7(%arg0: i32) -> (i32, i32) {
    %c0_i32 = arith.constant 0 : i32
    %c0_i32_0 = arith.constant 0 : i32
    return %arg0, %c0_i32 : i32, i32
  }
}

</mosaic_0001>

<llo_original>
// kernel: tpu_custom_call.1
$region0: #{tpu_custom_call.1}
  #allocation0 [shape = 'u32[]', space=smem, size = 0x4, offset = 0x4, fixed_abs, tag = 'smem constant byte address 0x4 - core index']
  #allocation1 [shape = 'u32[144,128]{1,0:T(1,128)}', space=vmem, size = 0x12000, scoped, tag = 'internal scratch']
  %s0 = inlined_call_operand.hbm [shape: f32[8,128], index: 0, kind: input, shape index: {}]
  %s1 = inlined_call_operand.hbm [shape: f32[16,128], index: 1, kind: input, shape index: {}]
  %s2 = inlined_call_operand.hbm [shape: f32[16,128], index: 2, kind: output, shape index: {}]
  %s3 = sld [smem:[#allocation0]]
  $region49: #{tpu_custom_call.1} parent=0
    _
  %s5 = ssub.s32 1, %s3
  %s6 = scalar_select 0, %s5, %s3
  $region1: #{tpu_custom_call.1} parent=0
    #allocation2 [shape = 'u8[4096]{0}', space=vmem, size = 0x1000, scoped, tag = 'input window, operand 0, single buffered']
    #allocation3 [shape = 's32[2]{0}', space=sflag, size = 0x8, scoped, tag = 'scoped memory for tpu_custom_call.1']
    #allocation4 [shape = 's32[2]{0}', space=sflag, size = 0x8, scoped, tag = 'scoped memory for tpu_custom_call.1']
    #allocation5 [shape = 'u8[8192]{0}', space=vmem, size = 0x2000, scoped, tag = 'input window, operand 1']
    #allocation6 [shape = 's32[2]{0}', space=sflag, size = 0x8, scoped, tag = 'scoped memory for tpu_custom_call.1']
    #allocation7 [shape = 'u8[8192]{0}', space=vmem, size = 0x2000, scoped, tag = 'output window, operand 0']
    %7 = vsyncpa [#allocation3], 0
    %8 = vsyncpa [#allocation6], 0
    %s9 = scalar_lea.sflag [#allocation6], 1
    %10 = vsyncpa %s9, 0
    %11 = vsyncpa [#allocation4], 0
    %s12 = scalar_lea.sflag [#allocation4], 1
    %13 = vsyncpa %s12, 0
    loop: start=0, step=1, limit=4
    $region2: #{tpu_custom_call.1} parent=1 // loop_pre_header
      _
    $region3: #{tpu_custom_call.1} parent=1 // loop_header
      %s15 = sphi 0, %s19
      %p16 = scmp.ge.s32.totalorder %s15, 4
      %s23 = sphi 0, %s23
      %s25 = sphi 0, %s23
      %s26 = sphi 0, %s25
      %s40 = sphi 0, %s26
      %s46 = sphi 0, %s48
      %s49 = sphi 0, %s46
      %s50 = sphi 0, %s49
      %s66 = sphi 0, %s50
      %s72 = sphi 0, %s74
      %s75 = sphi 0, %s72
      %s76 = sphi 0, %s75
      %s92 = sphi 0, %s76
    $region4: #{tpu_custom_call.1} parent=1 // loop_header_branch
      %18 = sbr.rel (%p16) target = $region8
    $region5: #{tpu_custom_call.1} parent=1 // loop_body
      %s20 = ssub.s32 %s15, 1
      %s21 = ssub.s32 %s15, 2
      %s22 = sadd.s32 %s15, 1
      %s24 = sadd.s32 %s23, 1
      %p27 = scmp.eq.s32.totalorder %s15, 1
      %p28 = scmp.ne.s32.totalorder %s23, %s25
      %p29 = scmp.eq.s32.totalorder %s15, 0
      %p30 = por %p28, %p29
      %p31 = scmp.ne.s32.totalorder %s23, %s25
      %p32 = scmp.eq.s32.totalorder %s20, 1
      %p33 = por %p31, %p32
      %p34 = scmp.ne.s32.totalorder %s25, %s26
      %p35 = scmp.eq.s32.totalorder %s20, 0
      %p36 = por %p34, %p35
      %p37 = scmp.ne.s32.totalorder %s25, %s26
      %p38 = scmp.eq.s32.totalorder %s21, 1
      %p39 = por %p37, %p38
      %p41 = scmp.ne.s32.totalorder %s26, %s40
      %p42 = scmp.eq.s32.totalorder %s21, 0
      %p43 = por %p41, %p42
      %s44 = ssub.s32 %s15, %s22
      %p45 = scmp.eq.s32.totalorder %s44, 0
      %s47 = sadd.s32 %s46, 1
      %s48 = scalar_select %p45, %s46, %s47
      %p51 = pneg %p45
      %p52 = scmp.eq.s32.totalorder %s15, 1
      %p53 = por %p51, %p52
      %p54 = scmp.ne.s32.totalorder %s46, %s49
      %p55 = scmp.eq.s32.totalorder %s15, 0
      %p56 = por %p54, %p55
      %p57 = scmp.ne.s32.totalorder %s46, %s49
      %p58 = scmp.eq.s32.totalorder %s20, 1
      %p59 = por %p57, %p58
      %p60 = scmp.ne.s32.totalorder %s49, %s50
      %p61 = scmp.eq.s32.totalorder %s20, 0
      %p62 = por %p60, %p61
      %p63 = scmp.ne.s32.totalorder %s49, %s50
      %p64 = scmp.eq.s32.totalorder %s21, 1
      %p65 = por %p63, %p64
      %p67 = scmp.ne.s32.totalorder %s50, %s66
      %p68 = scmp.eq.s32.totalorder %s21, 0
      %p69 = por %p67, %p68
      %s70 = ssub.s32 %s15, %s22
      %p71 = scmp.eq.s32.totalorder %s70, 0
      %s73 = sadd.s32 %s72, 1
      %s74 = scalar_select %p71, %s72, %s73
      %p77 = pneg %p71
      %p78 = scmp.eq.s32.totalorder %s15, 1
      %p79 = por %p77, %p78
      %p80 = scmp.ne.s32.totalorder %s72, %s75
      %p81 = scmp.eq.s32.totalorder %s15, 0
      %p82 = por %p80, %p81
      %p83 = scmp.ne.s32.totalorder %s72, %s75
      %p84 = scmp.eq.s32.totalorder %s20, 1
      %p85 = por %p83, %p84
      %p86 = scmp.ne.s32.totalorder %s75, %s76
      %p87 = scmp.eq.s32.totalorder %s20, 0
      %p88 = por %p86, %p87
      %p89 = scmp.ne.s32.totalorder %s75, %s76
      %p90 = scmp.eq.s32.totalorder %s21, 1
      %p91 = por %p89, %p90
      %p93 = scmp.ne.s32.totalorder %s76, %s92
      %p94 = scmp.eq.s32.totalorder %s21, 0
      %p95 = por %p93, %p94
      %p96 = scmp.le.s32.totalorder 1, %s15
      %p97 = scmp.lt.s32.totalorder %s15, 3
      %p98 = pnand %p96, %p97
      %p99 = pneg %p98
      // Predicated region
      $region9: #{tpu_custom_call.1} parent=5 // pred_check
        _
      $region10: #{tpu_custom_call.1} parent=5 // pred_check_branch
        %101 = sbr.rel (%p98) target = $region12
      $region11: #{tpu_custom_call.1} parent=5 // pred_region
        %s102 = ssub.s32 %s15, 1
        // Predicated region
        $region13: #{tpu_custom_call.1} parent=11 // pred_check
          %p103 = pneg %p36
        $region14: #{tpu_custom_call.1} parent=11 // pred_check_branch
          %105 = sbr.rel (%p103) target = $region16
        $region15: #{tpu_custom_call.1} parent=11 // pred_region
          %s107 = ssub.s32 128, 128
          %108 = vsyncadd [#allocation3], %s107
          %s110 = sshll.u32 [#allocation2], 4
          %s111 = int_to_ptr.vmem [resolvable:$true] %s110
          %113 = dma.hbm_to_vmem [thread:$0]  %s0, 128, %s111, [#allocation3]
        $region16: #{tpu_custom_call.1} parent=11 // pred_fallthru
          _
      $region12: #{tpu_custom_call.1} parent=5 // pred_fallthru
        _
      %p114 = scmp.lt.s32.totalorder %s15, 2
      // Predicated region
      $region17: #{tpu_custom_call.1} parent=5 // pred_check
        %p115 = pneg %p114
      $region18: #{tpu_custom_call.1} parent=5 // pred_check_branch
        %117 = sbr.rel (%p115) target = $region20
      $region19: #{tpu_custom_call.1} parent=5 // pred_region
        // Predicated region
        $region21: #{tpu_custom_call.1} parent=19 // pred_check
          %p118 = pneg %p56
        $region22: #{tpu_custom_call.1} parent=19 // pred_check_branch
          %120 = sbr.rel (%p118) target = $region24
        $region23: #{tpu_custom_call.1} parent=19 // pred_region
          %s121 = sand.u32 %s46, 1
          %s122 = scalar_lea.sflag [#allocation6], %s121
          %s123 = sand.u32 %s46, 1
          %s124 = smul.addr %s123, 8
          %s125 = scalar_lea.vmem [#allocation5], %s124
          %s127 = ssub.s32 128, 128
          %128 = vsyncadd %s122, %s127
          %s129 = smul.addr %s15, 128
          %s130 = scalar_lea.hbm %s1, %s129
          %s132 = sshll.u32 %s125, 4
          %s133 = int_to_ptr.vmem [resolvable:$true] %s132
          %135 = dma.hbm_to_vmem [thread:$0]  %s130, 128, %s133, %s122
        $region24: #{tpu_custom_call.1} parent=19 // pred_fallthru
          _
      $region20: #{tpu_custom_call.1} parent=5 // pred_fallthru
        _
      %p136 = scmp.le.s32.totalorder 1, %s15
      %p137 = scmp.lt.s32.totalorder %s15, 3
      %p138 = pnand %p136, %p137
      %p139 = pneg %p138
      // Predicated region
      $region25: #{tpu_custom_call.1} parent=5 // pred_check
        _
      $region26: #{tpu_custom_call.1} parent=5 // pred_check_branch
        %141 = sbr.rel (%p138) target = $region28
      $region27: #{tpu_custom_call.1} parent=5 // pred_region
        %s142 = ssub.s32 %s15, 1
        // Predicated region
        $region29: #{tpu_custom_call.1} parent=27 // pred_check
          %p143 = pneg %p36
        $region30: #{tpu_custom_call.1} parent=27 // pred_check_branch
          %145 = sbr.rel (%p143) target = $region32
        $region31: #{tpu_custom_call.1} parent=27 // pred_region
          %146 = dma.done [#allocation3], 128
        $region32: #{tpu_custom_call.1} parent=27 // pred_fallthru
          _
        %s147 = sand.u32 %s49, 1
        %s148 = scalar_lea.sflag [#allocation6], %s147
        %s149 = sand.u32 %s49, 1
        %s150 = smul.addr %s149, 8
        %s151 = scalar_lea.vmem [#allocation5], %s150
        // Predicated region
        $region33: #{tpu_custom_call.1} parent=27 // pred_check
          %p152 = pneg %p62
        $region34: #{tpu_custom_call.1} parent=27 // pred_check_branch
          %154 = sbr.rel (%p152) target = $region36
        $region35: #{tpu_custom_call.1} parent=27 // pred_region
          %155 = dma.done %s148, 128
        $region36: #{tpu_custom_call.1} parent=27 // pred_fallthru
          _
        %p156 = pneg %p36
        %p157 = pneg %p33
        %s158 = sand.u32 %s49, 1
        %s159 = scalar_lea.sflag [#allocation6], %s158
        %s160 = sand.u32 %s49, 1
        %s161 = smul.addr %s160, 8
        %s162 = scalar_lea.vmem [#allocation5], %s161
        %p163 = pneg %p62
        %p164 = pneg %p59
        %p165 = pneg %p88
        %p166 = pneg %p85
        %s167 = sand.u32 %s75, 1
        %s168 = scalar_lea.sflag [#allocation4], %s167
        %s169 = sand.u32 %s75, 1
        %s170 = smul.addr %s169, 8
        %s171 = scalar_lea.vmem [#allocation7], %s170
        %v172 = vld [vmem:[%s151] sm:$0xff]
        %v173 = vld [vmem:[#allocation2] sm:$0xff]
        %v174 = vadd.f32 %v172, %v173
        %175 = vst [vmem:[%s171] sm:$0xff] %v174
        %s176 = sand.u32 %s75, 1
        %s177 = scalar_lea.sflag [#allocation4], %s176
        %s178 = sand.u32 %s75, 1
        %s179 = smul.addr %s178, 8
        %s180 = scalar_lea.vmem [#allocation7], %s179
        // Predicated region
        $region37: #{tpu_custom_call.1} parent=27 // pred_check
          %p181 = pneg %p85
        $region38: #{tpu_custom_call.1} parent=27 // pred_check_branch
          %183 = sbr.rel (%p181) target = $region40
        $region39: #{tpu_custom_call.1} parent=27 // pred_region
          %s185 = ssub.s32 128, 128
          %186 = vsyncadd %s177, %s185
          %s187 = smul.addr %s20, 128
          %s188 = scalar_lea.hbm %s2, %s187
          %s190 = sshll.u32 %s180, 4
          %s191 = int_to_ptr.vmem [resolvable:$true] %s190
          %193 = dma.vmem_to_hbm [thread:$0]  %s191, 128, %s188, %s177
        $region40: #{tpu_custom_call.1} parent=27 // pred_fallthru
          _
      $region28: #{tpu_custom_call.1} parent=5 // pred_fallthru
        _
      %p194 = scmp.le.s32.totalorder 2, %s15
      // Predicated region
      $region41: #{tpu_custom_call.1} parent=5 // pred_check
        %p195 = pneg %p194
      $region42: #{tpu_custom_call.1} parent=5 // pred_check_branch
        %197 = sbr.rel (%p195) target = $region44
      $region43: #{tpu_custom_call.1} parent=5 // pred_region
        %s198 = ssub.s32 %s15, 2
        // Predicated region
        $region45: #{tpu_custom_call.1} parent=43 // pred_check
          %p199 = pneg %p91
        $region46: #{tpu_custom_call.1} parent=43 // pred_check_branch
          %201 = sbr.rel (%p199) target = $region48
        $region47: #{tpu_custom_call.1} parent=43 // pred_region
          %s202 = sand.u32 %s76, 1
          %s203 = scalar_lea.sflag [#allocation4], %s202
          %s204 = sand.u32 %s76, 1
          %s205 = smul.addr %s204, 8
          %s206 = scalar_lea.vmem [#allocation7], %s205
          %207 = dma.done %s203, 128
        $region48: #{tpu_custom_call.1} parent=43 // pred_fallthru
          _
      $region44: #{tpu_custom_call.1} parent=5 // pred_fallthru
        _
    $region6: #{tpu_custom_call.1} parent=1 // loop_footer
      %s19 = sadd.s32 1, %s15
    $region7: #{tpu_custom_call.1} parent=1 // loop_footer_branch
      %14 = sbr.rel target = $region3
    $region8: #{tpu_custom_call.1} parent=1 // loop_exit
      _
    %208 = vsyncpa [#allocation3], 1
    %s209 = scalar_lea.sflag [#allocation3], 1
    %210 = vsyncpa %s209, 1
    %211 = vsyncpa [#allocation6], 1
    %s212 = scalar_lea.sflag [#allocation6], 1
    %213 = vsyncpa %s212, 1
    %214 = vsyncpa [#allocation4], 1
    %s215 = scalar_lea.sflag [#allocation4], 1
    %216 = vsyncpa %s215, 1

// kernel: _encoder_forward_impl.1
$region0: #{_encoder_forward_impl.1}
  #allocation0 [shape = 'u32[]', space=smem, size = 0x4, offset = 0x4, fixed_abs, tag = 'smem constant byte address 0x4 - core index']
  #allocation1 [shape = 'u32[144,128]{1,0:T(1,128)}', space=vmem, size = 0x12000, scoped, tag = 'internal scratch']
  %s0 = inlined_call_operand.vmem [shape: f32[16,32], index: 0, kind: input, shape index: {}]
  %s1 = inlined_call_operand.vmem [shape: bf16[32,128], index: 1, kind: input, shape index: {}]
  %s2 = inlined_call_operand.vmem [shape: f32[1,128], index: 2, kind: input, shape index: {}]
  %s3 = inlined_call_operand.hbm [shape: bf16[128,256], index: 3, kind: input, shape index: {}]
  %s4 = inlined_call_operand.vmem [shape: f32[1,128], index: 4, kind: input, shape index: {}]
  %s5 = inlined_call_operand.vmem [shape: f32[1,128], index: 5, kind: input, shape index: {}]
  %s6 = inlined_call_operand.vmem [shape: f32[16,128], index: 6, kind: output, shape index: {0}]
  %s7 = inlined_call_operand.vmem [shape: f32[16,128], index: 7, kind: output, shape index: {1}]
  %8 = xla_tuple %s6, %s7
  %s9 = sld [smem:[#allocation0]]
  $region69: #{_encoder_forward_impl.1} parent=0
    _
  %s11 = ssub.s32 1, %s9
  %s12 = scalar_select 0, %s11, %s9
  $region1: #{_encoder_forward_impl.1} parent=0
    #allocation2 [shape = 'u8[65536]{0}', space=vmem, size = 0x10000, scoped, tag = 'input window, operand 3, single buffered']
    #allocation3 [shape = 's32[2]{0}', space=sflag, size = 0x8, scoped, tag = 'scoped memory for _encoder_forward_impl.1']
    %13 = vsyncpa [#allocation3], 0
    loop: start=0, step=1, limit=4
    $region2: #{_encoder_forward_impl.1} parent=1 // loop_pre_header
      _
    $region3: #{_encoder_forward_impl.1} parent=1 // loop_header
      %s15 = sphi 0, %s19
      %p16 = scmp.ge.s32.totalorder %s15, 4
      %s25 = sphi 0, %s27
      %s28 = sphi 0, %s25
      %s29 = sphi 0, %s28
      %s45 = sphi 0, %s29
      %s49 = sphi 0, %s49
      %s51 = sphi 0, %s49
      %s52 = sphi 0, %s51
      %s66 = sphi 0, %s52
      %s70 = sphi 0, %s70
      %s72 = sphi 0, %s70
      %s73 = sphi 0, %s72
      %s87 = sphi 0, %s73
      %s91 = sphi 0, %s91
      %s93 = sphi 0, %s91
      %s94 = sphi 0, %s93
      %s108 = sphi 0, %s94
      %s112 = sphi 0, %s112
      %s114 = sphi 0, %s112
      %s115 = sphi 0, %s114
      %s129 = sphi 0, %s115
      %s133 = sphi 0, %s133
      %s135 = sphi 0, %s133
      %s136 = sphi 0, %s135
      %s150 = sphi 0, %s136
      %s156 = sphi 0, %s158
      %s159 = sphi 0, %s156
      %s160 = sphi 0, %s159
      %s176 = sphi 0, %s160
      %s182 = sphi 0, %s184
      %s185 = sphi 0, %s182
      %s186 = sphi 0, %s185
      %s202 = sphi 0, %s186
    $region4: #{_encoder_forward_impl.1} parent=1 // loop_header_branch
      %18 = sbr.rel (%p16) target = $region8
    $region5: #{_encoder_forward_impl.1} parent=1 // loop_body
      %s20 = ssub.s32 %s15, 1
      %s21 = ssub.s32 %s15, 2
      %s22 = sadd.s32 %s15, 1
      %s23 = ssub.s32 %s15, %s22
      %p24 = scmp.eq.s32.totalorder %s23, 0
      %s26 = sadd.s32 %s25, 1
      %s27 = scalar_select %p24, %s25, %s26
      %p30 = pneg %p24
      %p31 = scmp.eq.s32.totalorder %s15, 1
      %p32 = por %p30, %p31
      %p33 = scmp.ne.s32.totalorder %s25, %s28
      %p34 = scmp.eq.s32.totalorder %s15, 0
      %p35 = por %p33, %p34
      %p36 = scmp.ne.s32.totalorder %s25, %s28
      %p37 = scmp.eq.s32.totalorder %s20, 1
      %p38 = por %p36, %p37
      %p39 = scmp.ne.s32.totalorder %s28, %s29
      %p40 = scmp.eq.s32.totalorder %s20, 0
      %p41 = por %p39, %p40
      %p42 = scmp.ne.s32.totalorder %s28, %s29
      %p43 = scmp.eq.s32.totalorder %s21, 1
      %p44 = por %p42, %p43
      %p46 = scmp.ne.s32.totalorder %s29, %s45
      %p47 = scmp.eq.s32.totalorder %s21, 0
      %p48 = por %p46, %p47
      %s50 = sadd.s32 %s49, 1
      %p53 = scmp.eq.s32.totalorder %s15, 1
      %p54 = scmp.ne.s32.totalorder %s49, %s51
      %p55 = scmp.eq.s32.totalorder %s15, 0
      %p56 = por %p54, %p55
      %p57 = scmp.ne.s32.totalorder %s49, %s51
      %p58 = scmp.eq.s32.totalorder %s20, 1
      %p59 = por %p57, %p58
      %p60 = scmp.ne.s32.totalorder %s51, %s52
      %p61 = scmp.eq.s32.totalorder %s20, 0
      %p62 = por %p60, %p61
      %p63 = scmp.ne.s32.totalorder %s51, %s52
      %p64 = scmp.eq.s32.totalorder %s21, 1
      %p65 = por %p63, %p64
      %p67 = scmp.ne.s32.totalorder %s52, %s66
      %p68 = scmp.eq.s32.totalorder %s21, 0
      %p69 = por %p67, %p68
      %s71 = sadd.s32 %s70, 1
      %p74 = scmp.eq.s32.totalorder %s15, 1
      %p75 = scmp.ne.s32.totalorder %s70, %s72
      %p76 = scmp.eq.s32.totalorder %s15, 0
      %p77 = por %p75, %p76
      %p78 = scmp.ne.s32.totalorder %s70, %s72
      %p79 = scmp.eq.s32.totalorder %s20, 1
      %p80 = por %p78, %p79
      %p81 = scmp.ne.s32.totalorder %s72, %s73
      %p82 = scmp.eq.s32.totalorder %s20, 0
      %p83 = por %p81, %p82
      %p84 = scmp.ne.s32.totalorder %s72, %s73
      %p85 = scmp.eq.s32.totalorder %s21, 1
      %p86 = por %p84, %p85
      %p88 = scmp.ne.s32.totalorder %s73, %s87
      %p89 = scmp.eq.s32.totalorder %s21, 0
      %p90 = por %p88, %p89
      %s92 = sadd.s32 %s91, 1
      %p95 = scmp.eq.s32.totalorder %s15, 1
      %p96 = scmp.ne.s32.totalorder %s91, %s93
      %p97 = scmp.eq.s32.totalorder %s15, 0
      %p98 = por %p96, %p97
      %p99 = scmp.ne.s32.totalorder %s91, %s93
      %p100 = scmp.eq.s32.totalorder %s20, 1
      %p101 = por %p99, %p100
      %p102 = scmp.ne.s32.totalorder %s93, %s94
      %p103 = scmp.eq.s32.totalorder %s20, 0
      %p104 = por %p102, %p103
      %p105 = scmp.ne.s32.totalorder %s93, %s94
      %p106 = scmp.eq.s32.totalorder %s21, 1
      %p107 = por %p105, %p106
      %p109 = scmp.ne.s32.totalorder %s94, %s108
      %p110 = scmp.eq.s32.totalorder %s21, 0
      %p111 = por %p109, %p110
      %s113 = sadd.s32 %s112, 1
      %p116 = scmp.eq.s32.totalorder %s15, 1
      %p117 = scmp.ne.s32.totalorder %s112, %s114
      %p118 = scmp.eq.s32.totalorder %s15, 0
      %p119 = por %p117, %p118
      %p120 = scmp.ne.s32.totalorder %s112, %s114
      %p121 = scmp.eq.s32.totalorder %s20, 1
      %p122 = por %p120, %p121
      %p123 = scmp.ne.s32.totalorder %s114, %s115
      %p124 = scmp.eq.s32.totalorder %s20, 0
      %p125 = por %p123, %p124
      %p126 = scmp.ne.s32.totalorder %s114, %s115
      %p127 = scmp.eq.s32.totalorder %s21, 1
      %p128 = por %p126, %p127
      %p130 = scmp.ne.s32.totalorder %s115, %s129
      %p131 = scmp.eq.s32.totalorder %s21, 0
      %p132 = por %p130, %p131
      %s134 = sadd.s32 %s133, 1
      %p137 = scmp.eq.s32.totalorder %s15, 1
      %p138 = scmp.ne.s32.totalorder %s133, %s135
      %p139 = scmp.eq.s32.totalorder %s15, 0
      %p140 = por %p138, %p139
      %p141 = scmp.ne.s32.totalorder %s133, %s135
      %p142 = scmp.eq.s32.totalorder %s20, 1
      %p143 = por %p141, %p142
      %p144 = scmp.ne.s32.totalorder %s135, %s136
      %p145 = scmp.eq.s32.totalorder %s20, 0
      %p146 = por %p144, %p145
      %p147 = scmp.ne.s32.totalorder %s135, %s136
      %p148 = scmp.eq.s32.totalorder %s21, 1
      %p149 = por %p147, %p148
      %p151 = scmp.ne.s32.totalorder %s136, %s150
      %p152 = scmp.eq.s32.totalorder %s21, 0
      %p153 = por %p151, %p152
      %s154 = ssub.s32 %s15, %s22
      %p155 = scmp.eq.s32.totalorder %s154, 0
      %s157 = sadd.s32 %s156, 1
      %s158 = scalar_select %p155, %s156, %s157
      %p161 = pneg %p155
      %p162 = scmp.eq.s32.totalorder %s15, 1
      %p163 = por %p161, %p162
      %p164 = scmp.ne.s32.totalorder %s156, %s159
      %p165 = scmp.eq.s32.totalorder %s15, 0
      %p166 = por %p164, %p165
      %p167 = scmp.ne.s32.totalorder %s156, %s159
      %p168 = scmp.eq.s32.totalorder %s20, 1
      %p169 = por %p167, %p168
      %p170 = scmp.ne.s32.totalorder %s159, %s160
      %p171 = scmp.eq.s32.totalorder %s20, 0
      %p172 = por %p170, %p171
      %p173 = scmp.ne.s32.totalorder %s159, %s160
      %p174 = scmp.eq.s32.totalorder %s21, 1
      %p175 = por %p173, %p174
      %p177 = scmp.ne.s32.totalorder %s160, %s176
      %p178 = scmp.eq.s32.totalorder %s21, 0
      %p179 = por %p177, %p178
      %s180 = ssub.s32 %s15, %s22
      %p181 = scmp.eq.s32.totalorder %s180, 0
      %s183 = sadd.s32 %s182, 1
      %s184 = scalar_select %p181, %s182, %s183
      %p187 = pneg %p181
      %p188 = scmp.eq.s32.totalorder %s15, 1
      %p189 = por %p187, %p188
      %p190 = scmp.ne.s32.totalorder %s182, %s185
      %p191 = scmp.eq.s32.totalorder %s15, 0
      %p192 = por %p190, %p191
      %p193 = scmp.ne.s32.totalorder %s182, %s185
      %p194 = scmp.eq.s32.totalorder %s20, 1
      %p195 = por %p193, %p194
      %p196 = scmp.ne.s32.totalorder %s185, %s186
      %p197 = scmp.eq.s32.totalorder %s20, 0
      %p198 = por %p196, %p197
      %p199 = scmp.ne.s32.totalorder %s185, %s186
      %p200 = scmp.eq.s32.totalorder %s21, 1
      %p201 = por %p199, %p200
      %p203 = scmp.ne.s32.totalorder %s186, %s202
      %p204 = scmp.eq.s32.totalorder %s21, 0
      %p205 = por %p203, %p204
      %p206 = scmp.le.s32.totalorder 1, %s15
      %p207 = scmp.lt.s32.totalorder %s15, 3
      %p208 = pnand %p206, %p207
      %p209 = pneg %p208
      // Predicated region
      $region9: #{_encoder_forward_impl.1} parent=5 // pred_check
        _
      $region10: #{_encoder_forward_impl.1} parent=5 // pred_check_branch
        %211 = sbr.rel (%p208) target = $region12
      $region11: #{_encoder_forward_impl.1} parent=5 // pred_region
        %s212 = ssub.s32 %s15, 1
        // Predicated region
        $region13: #{_encoder_forward_impl.1} parent=11 // pred_check
          %p213 = pneg %p62
        $region14: #{_encoder_forward_impl.1} parent=11 // pred_check_branch
          %215 = sbr.rel (%p213) target = $region16
        $region15: #{_encoder_forward_impl.1} parent=11 // pred_region
          _
        $region16: #{_encoder_forward_impl.1} parent=11 // pred_fallthru
          _
        // Predicated region
        $region17: #{_encoder_forward_impl.1} parent=11 // pred_check
          %p216 = pneg %p83
        $region18: #{_encoder_forward_impl.1} parent=11 // pred_check_branch
          %218 = sbr.rel (%p216) target = $region20
        $region19: #{_encoder_forward_impl.1} parent=11 // pred_region
          _
        $region20: #{_encoder_forward_impl.1} parent=11 // pred_fallthru
          _
        // Predicated region
        $region21: #{_encoder_forward_impl.1} parent=11 // pred_check
          %p219 = pneg %p104
        $region22: #{_encoder_forward_impl.1} parent=11 // pred_check_branch
          %221 = sbr.rel (%p219) target = $region24
        $region23: #{_encoder_forward_impl.1} parent=11 // pred_region
          %s223 = ssub.s32 2048, 2048
          %224 = vsyncadd [#allocation3], %s223
          %s225 = sshll.u32 [#allocation2], 4
          %s226 = int_to_ptr.vmem [resolvable:$true] %s225
          %231 = dma.hbm_to_vmem [thread:$0]  %s3, 2048, %s226, [#allocation3], 128, 128, 8
        $region24: #{_encoder_forward_impl.1} parent=11 // pred_fallthru
          _
        // Predicated region
        $region25: #{_encoder_forward_impl.1} parent=11 // pred_check
          %p232 = pneg %p125
        $region26: #{_encoder_forward_impl.1} parent=11 // pred_check_branch
          %234 = sbr.rel (%p232) target = $region28
        $region27: #{_encoder_forward_impl.1} parent=11 // pred_region
          _
        $region28: #{_encoder_forward_impl.1} parent=11 // pred_fallthru
          _
        // Predicated region
        $region29: #{_encoder_forward_impl.1} parent=11 // pred_check
          %p235 = pneg %p146
        $region30: #{_encoder_forward_impl.1} parent=11 // pred_check_branch
          %237 = sbr.rel (%p235) target = $region32
        $region31: #{_encoder_forward_impl.1} parent=11 // pred_region
          _
        $region32: #{_encoder_forward_impl.1} parent=11 // pred_fallthru
          _
      $region12: #{_encoder_forward_impl.1} parent=5 // pred_fallthru
        _
      %p238 = scmp.lt.s32.totalorder %s15, 2
      // Predicated region
      $region33: #{_encoder_forward_impl.1} parent=5 // pred_check
        %p239 = pneg %p238
      $region34: #{_encoder_forward_impl.1} parent=5 // pred_check_branch
        %241 = sbr.rel (%p239) target = $region36
      $region35: #{_encoder_forward_impl.1} parent=5 // pred_region
        // Predicated region
        $region37: #{_encoder_forward_impl.1} parent=35 // pred_check
          %p242 = pneg %p35
        $region38: #{_encoder_forward_impl.1} parent=35 // pred_check_branch
          %244 = sbr.rel (%p242) target = $region40
        $region39: #{_encoder_forward_impl.1} parent=35 // pred_region
          %p245 = scmp.lt.s32.totalorder %s15, 1
          %s246 = scalar_select %p245, %s15, 1
          %s247 = smul.addr %s246, 8
          %s248 = scalar_lea.vmem %s0, %s247
        $region40: #{_encoder_forward_impl.1} parent=35 // pred_fallthru
          _
      $region36: #{_encoder_forward_impl.1} parent=5 // pred_fallthru
        _
      %p249 = scmp.le.s32.totalorder 1, %s15
      %p250 = scmp.lt.s32.totalorder %s15, 3
      %p251 = pnand %p249, %p250
      %p252 = pneg %p251
      // Predicated region
      $region41: #{_encoder_forward_impl.1} parent=5 // pred_check
        _
      $region42: #{_encoder_forward_impl.1} parent=5 // pred_check_branch
        %254 = sbr.rel (%p251) target = $region44
      $region43: #{_encoder_forward_impl.1} parent=5 // pred_region
        %s255 = ssub.s32 %s15, 1
        // Predicated region
        $region45: #{_encoder_forward_impl.1} parent=43 // pred_check
          %p256 = pneg %p104
        $region46: #{_encoder_forward_impl.1} parent=43 // pred_check_branch
          %258 = sbr.rel (%p256) target = $region48
        $region47: #{_encoder_forward_impl.1} parent=43 // pred_region
          %259 = dma.done [#allocation3], 2048
        $region48: #{_encoder_forward_impl.1} parent=43 // pred_fallthru
          _
        %p260 = scmp.lt.s32.totalorder %s20, 1
        %s261 = scalar_select %p260, %s20, 1
        %s262 = smul.addr %s261, 8
        %s263 = scalar_lea.vmem %s0, %s262
        %p264 = pneg %p41
        %p265 = pneg %p38
        %p266 = pneg %p62
        %p267 = pneg %p59
        %p268 = pneg %p83
        %p269 = pneg %p80
        %p270 = pneg %p104
        %p271 = pneg %p101
        %p272 = pneg %p125
        %p273 = pneg %p122
        %p274 = pneg %p146
        %p275 = pneg %p143
        %p276 = pneg %p172
        %p277 = pneg %p169
        %p278 = scmp.lt.s32.totalorder %s20, 1
        %s279 = scalar_select %p278, %s20, 1
        %s280 = smul.addr %s279, 8
        %s281 = scalar_lea.vmem %s6, %s280
        %p282 = pneg %p198
        %p283 = pneg %p195
        %p284 = scmp.lt.s32.totalorder %s20, 1
        %s285 = scalar_select %p284, %s20, 1
        %s286 = smul.addr %s285, 8
        %s287 = scalar_lea.vmem %s7, %s286
        %p288 = scmp.lt.s32.totalorder %s20, 1
        %s289 = scalar_select %p288, %s20, 1
        %s290 = smul.addr %s289, 8
        %s291 = scalar_lea.vmem %s0, %s290
        %p292 = scmp.lt.s32.totalorder %s20, 1
        %s293 = scalar_select %p292, %s20, 1
        %s294 = smul.addr %s293, 8
        %s295 = scalar_lea.vmem %s6, %s294
        %p296 = scmp.lt.s32.totalorder %s20, 1
        %s297 = scalar_select %p296, %s20, 1
        %s298 = smul.addr %s297, 8
        %s299 = scalar_lea.vmem %s7, %s298
        %v301 = vld [vmem:[%s291] sm:$0xff]
        %v302 = vpack.c.bf16 %v301, %v301
        %v303 = vld [vmem:[%s1] sm:$0xf]
        %v304 = vld [vmem:[%s1 + $0x4] sm:$0xf]
        %v305 = vld [vmem:[%s1 + $0x8] sm:$0xf]
        %v306 = vld [vmem:[%s1 + $0xc] sm:$0xf]
        %v307 = vld [vmem:[%s2] sm:$0x1]
        %v309 = vlaneseq
        %v310 = vshrl.u32 %v309, 7
        %v311 = vsub.s32 0, %v310
        %v312 = vrot.slane %v307, %v311
        %v318 = vunpack.c.l.b16 %v303
        %v319 = vunpack.c.l.b16 %v304
        %v320 = vunpack.c.l.b16 %v305
        %v321 = vunpack.c.l.b16 %v306
        %v322 = vpack.c.b16 %v319, %v318
        %v323 = vpack.c.b16 %v321, %v320
        %vm326 = vcmask 261120
        %v328 = vsel %vm326, %v302, 0
        %330 = vmatprep.subr.bf16.mxu0 0
        %331 = vmatpush1.bf16.msra.mxu0 %v322
        %332 = vmatprep.subr.bf16.mxu0 0
        %333 = vmatpush1.bf16.msra.mxu0 %v323
        %334 = vmatprep.subr.bf16.mxu0 0
        %335 = vmatpush1.bf16.msra.mxu0 0
        %336 = vmatprep.subr.bf16.mxu0 0
        %337 = vmatpush1.bf16.msra.mxu0 0
        %338 = vmatprep.subr.bf16.mxu0 0
        %339 = vmatpush1.bf16.msra.mxu0 0
        %340 = vmatprep.subr.bf16.mxu0 0
        %341 = vmatpush1.bf16.msra.mxu0 0
        %342 = vmatprep.subr.bf16.mxu0 0
        %343 = vmatpush1.bf16.msra.mxu0 0
        %344 = vmatprep.subr.bf16.mxu0 0
        %345 = vmatpush1.bf16.msra.mxu0 0
        %346 = vmatprep.subr.bf16.mxu0 0
        %347 = vmatpush1.bf16.msra.mxu0 0
        %348 = vmatprep.subr.bf16.mxu0 0
        %349 = vmatpush1.bf16.msra.mxu0 0
        %350 = vmatprep.subr.bf16.mxu0 0
        %351 = vmatpush1.bf16.msra.mxu0 0
        %352 = vmatprep.subr.bf16.mxu0 0
        %353 = vmatpush1.bf16.msra.mxu0 0
        %354 = vmatprep.subr.bf16.mxu0 0
        %355 = vmatpush1.bf16.msra.mxu0 0
        %356 = vmatprep.subr.bf16.mxu0 0
        %357 = vmatpush1.bf16.msra.mxu0 0
        %358 = vmatprep.subr.bf16.mxu0 0
        %359 = vmatpush1.bf16.msra.mxu0 0
        %360 = vmatprep.subr.bf16.mxu0 0
        %361 = vmatpush1.bf16.msra.mxu0 0
        %362 = vmatprep.mubr.bf16.mxu0 0
        %363 = vmatmul.mubr.bf16.gmra.mrb[0].mxu0 %v328
        %v364 = vpop.f32.mrb[0].mxu0
        %v365 = vadd.f32 %v312, %v364
        %v366 = vpop.f32.mrb[0].mxu0
        %v367 = vpop.f32.mrb[0].mxu0
        %v368 = vpop.f32.mrb[0].mxu0
        %369 = vdwg.mxu0
        %v370 = vmax.f32 %v365, 0.0
        %v371 = vpack.c.bf16 %v370, %v370
        %v372 = vld [vmem:[#allocation2] sm:$0xff]
        %v373 = vld [vmem:[#allocation2 + $0x8] sm:$0xff]
        %v374 = vld [vmem:[#allocation2 + $0x10] sm:$0xff]
        %v375 = vld [vmem:[#allocation2 + $0x18] sm:$0xff]
        %v376 = vld [vmem:[#allocation2 + $0x20] sm:$0xff]
        %v377 = vld [vmem:[#allocation2 + $0x28] sm:$0xff]
        %v378 = vld [vmem:[#allocation2 + $0x30] sm:$0xff]
        %v379 = vld [vmem:[#allocation2 + $0x38] sm:$0xff]
        %v380 = vld [vmem:[#allocation2 + $0x40] sm:$0xff]
        %v381 = vld [vmem:[#allocation2 + $0x48] sm:$0xff]
        %v382 = vld [vmem:[#allocation2 + $0x50] sm:$0xff]
        %v383 = vld [vmem:[#allocation2 + $0x58] sm:$0xff]
        %v384 = vld [vmem:[#allocation2 + $0x60] sm:$0xff]
        %v385 = vld [vmem:[#allocation2 + $0x68] sm:$0xff]
        %v386 = vld [vmem:[#allocation2 + $0x70] sm:$0xff]
        %v387 = vld [vmem:[#allocation2 + $0x78] sm:$0xff]
        %v404 = vunpack.c.l.b16 %v372
        %v405 = vunpack.c.h.b16 %v372
        %v406 = vunpack.c.l.b16 %v373
        %v407 = vunpack.c.h.b16 %v373
        %v408 = vunpack.c.l.b16 %v374
        %v409 = vunpack.c.h.b16 %v374
        %v410 = vunpack.c.l.b16 %v375
        %v411 = vunpack.c.h.b16 %v375
        %v412 = vunpack.c.l.b16 %v376
        %v413 = vunpack.c.h.b16 %v376
        %v414 = vunpack.c.l.b16 %v377
        %v415 = vunpack.c.h.b16 %v377
        %v416 = vunpack.c.l.b16 %v378
        %v417 = vunpack.c.h.b16 %v378
        %v418 = vunpack.c.l.b16 %v379
        %v419 = vunpack.c.h.b16 %v379
        %v420 = vunpack.c.l.b16 %v380
        %v421 = vunpack.c.h.b16 %v380
        %v422 = vunpack.c.l.b16 %v381
        %v423 = vunpack.c.h.b16 %v381
        %v424 = vunpack.c.l.b16 %v382
        %v425 = vunpack.c.h.b16 %v382
        %v426 = vunpack.c.l.b16 %v383
        %v427 = vunpack.c.h.b16 %v383
        %v428 = vunpack.c.l.b16 %v384
        %v429 = vunpack.c.h.b16 %v384
        %v430 = vunpack.c.l.b16 %v385
        %v431 = vunpack.c.h.b16 %v385
        %v432 = vunpack.c.l.b16 %v386
        %v433 = vunpack.c.h.b16 %v386
        %v434 = vunpack.c.l.b16 %v387
        %v435 = vunpack.c.h.b16 %v387
        %v436 = vpack.c.b16 %v406, %v404
        %v437 = vpack.c.b16 %v407, %v405
        %v438 = vpack.c.b16 %v410, %v408
        %v439 = vpack.c.b16 %v411, %v409
        %v440 = vpack.c.b16 %v414, %v412
        %v441 = vpack.c.b16 %v415, %v413
        %v442 = vpack.c.b16 %v418, %v416
        %v443 = vpack.c.b16 %v419, %v417
        %v444 = vpack.c.b16 %v422, %v420
        %v445 = vpack.c.b16 %v423, %v421
        %v446 = vpack.c.b16 %v426, %v424
        %v447 = vpack.c.b16 %v427, %v425
        %v448 = vpack.c.b16 %v430, %v428
        %v449 = vpack.c.b16 %v431, %v429
        %v450 = vpack.c.b16 %v434, %v432
        %v451 = vpack.c.b16 %v435, %v433
        %468 = vmatprep.subr.bf16.mxu0 %v437
        %469 = vmatpush1.bf16.msra.mxu0 %v436
        %470 = vmatprep.subr.bf16.mxu0 %v439
        %471 = vmatpush1.bf16.msra.mxu0 %v438
        %472 = vmatprep.subr.bf16.mxu0 %v441
        %473 = vmatpush1.bf16.msra.mxu0 %v440
        %474 = vmatprep.subr.bf16.mxu0 %v443
        %475 = vmatpush1.bf16.msra.mxu0 %v442
        %476 = vmatprep.subr.bf16.mxu0 %v445
        %477 = vmatpush1.bf16.msra.mxu0 %v444
        %478 = vmatprep.subr.bf16.mxu0 %v447
        %479 = vmatpush1.bf16.msra.mxu0 %v446
        %480 = vmatprep.subr.bf16.mxu0 %v449
        %481 = vmatpush1.bf16.msra.mxu0 %v448
        %482 = vmatprep.subr.bf16.mxu0 %v451
        %483 = vmatpush1.bf16.msra.mxu0 %v450
        %484 = vmatprep.subr.bf16.mxu0 0
        %485 = vmatpush1.bf16.msra.mxu0 0
        %486 = vmatprep.subr.bf16.mxu0 0
        %487 = vmatpush1.bf16.msra.mxu0 0
        %488 = vmatprep.subr.bf16.mxu0 0
        %489 = vmatpush1.bf16.msra.mxu0 0
        %490 = vmatprep.subr.bf16.mxu0 0
        %491 = vmatpush1.bf16.msra.mxu0 0
        %492 = vmatprep.subr.bf16.mxu0 0
        %493 = vmatpush1.bf16.msra.mxu0 0
        %494 = vmatprep.subr.bf16.mxu0 0
        %495 = vmatpush1.bf16.msra.mxu0 0
        %496 = vmatprep.subr.bf16.mxu0 0
        %497 = vmatpush1.bf16.msra.mxu0 0
        %498 = vmatprep.subr.bf16.mxu0 0
        %499 = vmatpush1.bf16.msra.mxu0 0
        %500 = vmatprep.mubr.bf16.mxu0 0
        %501 = vmatmul.mubr.bf16.gmra.mrb[0].mxu0 %v371
        %v502 = vpop.f32.mrb[0].mxu0
        %v503 = vadd.f32 0.0, %v502
        %v504 = vpop.f32.mrb[0].mxu0
        %v505 = vadd.f32 0.0, %v504
        %v506 = vpop.f32.mrb[0].mxu0
        %v507 = vpop.f32.mrb[0].mxu0
        %508 = vdwg.mxu0
        %v509 = vld [vmem:[%s4] sm:$0x1]
        %v511 = vlaneseq
        %v512 = vshrl.u32 %v511, 7
        %v513 = vsub.s32 0, %v512
        %v514 = vrot.slane %v509, %v513
        %v516 = vadd.f32 %v503, %v514
        %517 = vst [vmem:[%s295] sm:$0xff] %v516
        %v518 = vld [vmem:[%s5] sm:$0x1]
        %v520 = vlaneseq
        %v521 = vshrl.u32 %v520, 7
        %v522 = vsub.s32 0, %v521
        %v523 = vrot.slane %v518, %v522
        %v525 = vadd.f32 %v505, %v523
        %526 = vst [vmem:[%s299] sm:$0xff] %v525
        %p527 = scmp.lt.s32.totalorder %s20, 1
        %s528 = scalar_select %p527, %s20, 1
        %s529 = smul.addr %s528, 8
        %s530 = scalar_lea.vmem %s6, %s529
        %p531 = scmp.lt.s32.totalorder %s20, 1
        %s532 = scalar_select %p531, %s20, 1
        %s533 = smul.addr %s532, 8
        %s534 = scalar_lea.vmem %s7, %s533
        // Predicated region
        $region49: #{_encoder_forward_impl.1} parent=43 // pred_check
          %p535 = pneg %p169
        $region50: #{_encoder_forward_impl.1} parent=43 // pred_check_branch
          %537 = sbr.rel (%p535) target = $region52
        $region51: #{_encoder_forward_impl.1} parent=43 // pred_region
          _
        $region52: #{_encoder_forward_impl.1} parent=43 // pred_fallthru
          _
        // Predicated region
        $region53: #{_encoder_forward_impl.1} parent=43 // pred_check
          %p538 = pneg %p195
        $region54: #{_encoder_forward_impl.1} parent=43 // pred_check_branch
          %540 = sbr.rel (%p538) target = $region56
        $region55: #{_encoder_forward_impl.1} parent=43 // pred_region
          _
        $region56: #{_encoder_forward_impl.1} parent=43 // pred_fallthru
          _
      $region44: #{_encoder_forward_impl.1} parent=5 // pred_fallthru
        _
      %p541 = scmp.le.s32.totalorder 2, %s15
      // Predicated region
      $region57: #{_encoder_forward_impl.1} parent=5 // pred_check
        %p542 = pneg %p541
      $region58: #{_encoder_forward_impl.1} parent=5 // pred_check_branch
        %544 = sbr.rel (%p542) target = $region60
      $region59: #{_encoder_forward_impl.1} parent=5 // pred_region
        %s545 = ssub.s32 %s15, 2
        // Predicated region
        $region61: #{_encoder_forward_impl.1} parent=59 // pred_check
          %p546 = pneg %p175
        $region62: #{_encoder_forward_impl.1} parent=59 // pred_check_branch
          %548 = sbr.rel (%p546) target = $region64
        $region63: #{_encoder_forward_impl.1} parent=59 // pred_region
          %p549 = scmp.lt.s32.totalorder %s21, 1
          %s550 = scalar_select %p549, %s21, 1
          %s551 = smul.addr %s550, 8
          %s552 = scalar_lea.vmem %s6, %s551
        $region64: #{_encoder_forward_impl.1} parent=59 // pred_fallthru
          _
        // Predicated region
        $region65: #{_encoder_forward_impl.1} parent=59 // pred_check
          %p553 = pneg %p201
        $region66: #{_encoder_forward_impl.1} parent=59 // pred_check_branch
          %555 = sbr.rel (%p553) target = $region68
        $region67: #{_encoder_forward_impl.1} parent=59 // pred_region
          %p556 = scmp.lt.s32.totalorder %s21, 1
          %s557 = scalar_select %p556, %s21, 1
          %s558 = smul.addr %s557, 8
          %s559 = scalar_lea.vmem %s7, %s558
        $region68: #{_encoder_forward_impl.1} parent=59 // pred_fallthru
          _
      $region60: #{_encoder_forward_impl.1} parent=5 // pred_fallthru
        _
    $region6: #{_encoder_forward_impl.1} parent=1 // loop_footer
      %s19 = sadd.s32 1, %s15
    $region7: #{_encoder_forward_impl.1} parent=1 // loop_footer_branch
      %14 = sbr.rel target = $region3
    $region8: #{_encoder_forward_impl.1} parent=1 // loop_exit
      _
    %560 = vsyncpa [#allocation3], 1
    %s561 = scalar_lea.sflag [#allocation3], 1
    %562 = vsyncpa %s561, 1

</llo_original>
